<compile_context>
chip_gen: v7x
topology: tpu7x:2x2x1
jax: 0.10.0
libtpu: 0.0.40
codegen_flags: <defaults>
</compile_context>

<pallas_src>
import functools

import jax
import jax.numpy as jnp
from jax import lax
from jax.experimental import pallas as pl
from jax.experimental.pallas import tpu as pltpu


_NEG_LARGE = float(jnp.finfo(jnp.float32).min)   # safe "-inf" for masked max


def _round_up(x, m):
    return (x + m - 1) // m * m


def _tpu_vmem_capacity():
    """Physical VMEM per TensorCore (generation aware); conservative v7x fallback."""
    try:
        info = pltpu.get_tpu_info()
        cap = getattr(info, "vmem_capacity_bytes", None)
        if cap:
            return int(cap)
    except Exception:
        pass
    return 64 << 20          # v7x-safe default


def _clamp_vmem(need, cap):
    return int(min(max(need, 16 << 20), cap))


# ----------------------------------------------------------------------------
# Fused single-pass kernel: whole HW resident, `bt` batch rows per grid step.
#   read x once, write out once; pooling + tiny batched FC + broadcast multiply.
# ----------------------------------------------------------------------------
def _fused_kernel(x_ref, w1t_ref, w2t_ref, o_ref):
    x = x_ref[...]                                   # (bt, C, HW) in I/O dtype
    bt = x.shape[0]
    hw = x.shape[2]
    w1t = w1t_ref[...]                               # (C, C_mid) f32
    w2t = w2t_ref[...]                               # (C_mid, C) f32

    # Global pooling over the spatial (lane) axis. The block spans exactly HW elements,
    # so no masking is needed; the sum accumulates in f32.
    avg = jnp.sum(x, axis=2, dtype=jnp.float32) * (1.0 / hw)    # (bt, C)
    mx = jnp.max(x, axis=2).astype(jnp.float32)                 # (bt, C)

    # Batched tiny FC: both pooled paths for all bt rows in exactly two matmuls.
    p = jnp.concatenate([avg, mx], axis=0)                      # (2*bt, C)
    h = jnp.maximum(jnp.dot(p, w1t, preferred_element_type=jnp.float32), 0.0)
    s = jax.nn.sigmoid(jnp.dot(h, w2t, preferred_element_type=jnp.float32))
    scale = s[:bt] + s[bt:]                                     # (bt, C)  per-path sigmoid summed

    # One vectorized broadcast multiply + single full-block store, in the I/O dtype.
    o_ref[...] = (x * scale[:, :, None].astype(x.dtype)).astype(o_ref.dtype)


# ----------------------------------------------------------------------------
# Two-pass fallback for large C*HW (v7x has only 64 MiB VMEM).
#   Pass A: accumulate sum/max over HW tiles + tiny FC -> per-channel scale.
#   Pass B: apply the scale, tiled over HW.
# ----------------------------------------------------------------------------
def _pool_fc_kernel(x_ref, w1_ref, w2_ref, scale_ref, sum_sc, max_sc, *, hw_true, hw_tile):
    h = pl.program_id(1)
    last = pl.num_programs(1) - 1
    x = x_ref[0]                                     # (C, hw_tile), I/O dtype
    needs_mask = (hw_true % hw_tile) != 0            # static

    @pl.when(h == 0)
    def _():
        sum_sc[...] = jnp.zeros_like(sum_sc)
        max_sc[...] = jnp.full_like(max_sc, _NEG_LARGE)

    def accumulate(xv):
        sum_sc[...] += jnp.sum(xv, axis=1, keepdims=True, dtype=jnp.float32)
        max_sc[...] = jnp.maximum(
            max_sc[...], jnp.max(xv, axis=1, keepdims=True).astype(jnp.float32))

    if needs_mask:
        # Full tiles pay no mask cost; only the (partial) last tile builds a row mask.
        @pl.when(h != last)
        def _():
            accumulate(x)

        @pl.when(h == last)
        def _():
            lane = lax.broadcasted_iota(jnp.int32, (1, hw_tile), 1)
            valid = lane < (hw_true - h * hw_tile)                     # (1, hw_tile)
            neg = jnp.asarray(_NEG_LARGE, x.dtype)
            zero = jnp.zeros((), x.dtype)
            sum_sc[...] += jnp.sum(jnp.where(valid, x, zero),
                                   axis=1, keepdims=True, dtype=jnp.float32)
            max_sc[...] = jnp.maximum(
                max_sc[...],
                jnp.max(jnp.where(valid, x, neg), axis=1, keepdims=True).astype(jnp.float32))
    else:
        accumulate(x)

    @pl.when(h == last)
    def _():
        avg = sum_sc[...] * (1.0 / hw_true)                            # (C, 1)
        p = jnp.concatenate([avg, max_sc[...]], axis=1)                # (C, 2) cols [avg, max]
        hmid = jnp.maximum(jnp.dot(w1_ref[...], p,
                                   preferred_element_type=jnp.float32), 0.0)   # (C_mid, 2)
        s = jax.nn.sigmoid(jnp.dot(w2_ref[...], hmid,
                                   preferred_element_type=jnp.float32))        # (C, 2)
        scale_ref[0] = s[:, 0:1] + s[:, 1:2]                           # (C, 1)


def _apply_kernel(x_ref, s_ref, o_ref):
    x = x_ref[...]                                   # (1, C, hw_tile)
    s = s_ref[...].astype(x.dtype)                   # (1, C, 1)
    o_ref[...] = (x * s).astype(o_ref.dtype)


# ----------------------------------------------------------------------------
# Wrappers
# ----------------------------------------------------------------------------
def _channel_attention_fused(x_flat, w1_2d, w2_2d, *, target_block_bytes, max_bt,
                             budget, vmem_cap):
    B, C, HW = x_flat.shape
    C_mid = w1_2d.shape[0]
    itemsize = jnp.dtype(x_flat.dtype).itemsize
    per_batch = C * HW * itemsize

    # batch rows per block: big enough to amortize per-step overhead, bounded by the VMEM budget.
    bt = int(max(1, min(B, max_bt,
                        max(1, target_block_bytes // per_batch),
                        max(1, (budget - (2 << 20)) // (4 * per_batch)))))
    grid = (pl.cdiv(B, bt),)                         # ragged batch tail handled by partial blocks

    block_bytes = bt * per_batch
    vmem_limit = _clamp_vmem(4 * block_bytes + (4 << 20), vmem_cap)

    w1t = w1_2d.T                                    # (C, C_mid)
    w2t = w2_2d.T                                    # (C_mid, C)

    return pl.pallas_call(
        _fused_kernel,
        out_shape=jax.ShapeDtypeStruct((B, C, HW), x_flat.dtype),
        grid_spec=pltpu.PrefetchScalarGridSpec(
            num_scalar_prefetch=0,
            grid=grid,
            in_specs=[
                pl.BlockSpec((bt, C, HW), lambda i: (i, 0, 0)),
                pl.BlockSpec((C, C_mid), lambda i: (0, 0)),
                pl.BlockSpec((C_mid, C), lambda i: (0, 0)),
            ],
            out_specs=pl.BlockSpec((bt, C, HW), lambda i: (i, 0, 0)),
        ),
        compiler_params=pltpu.CompilerParams(
            dimension_semantics=("parallel",),
            vmem_limit_bytes=vmem_limit,
        ),
    )(x_flat, w1t, w2t)


def _channel_attention_two_pass(x_flat, w1_2d, w2_2d, *, target_block_bytes, hw_tile, vmem_cap):
    B, C, HW = x_flat.shape
    C_mid = w1_2d.shape[0]
    itemsize = jnp.dtype(x_flat.dtype).itemsize
    hw_cap = _round_up(HW, 128)

    # Pass B holds input + output blocks; pass A is a pure streaming read -> 2x tile.
    if hw_tile is None:
        hw_tile_b = (target_block_bytes // (2 * C * itemsize)) // 128 * 128
    else:
        hw_tile_b = (int(hw_tile) // 128) * 128
    hw_tile_b = int(min(max(hw_tile_b, 128), hw_cap))
    hw_tile_a = int(min(2 * hw_tile_b, hw_cap))

    # Pass A: pooled stats accumulated over HW tiles in VMEM scratch + tiny FC -> per-channel scale.
    scale = pl.pallas_call(
        functools.partial(_pool_fc_kernel, hw_true=HW, hw_tile=hw_tile_a),
        out_shape=jax.ShapeDtypeStruct((B, C, 1), jnp.float32),
        grid_spec=pltpu.PrefetchScalarGridSpec(
            num_scalar_prefetch=0,
            grid=(B, pl.cdiv(HW, hw_tile_a)),
            in_specs=[
                pl.BlockSpec((1, C, hw_tile_a), lambda b, h: (b, 0, h)),
                pl.BlockSpec((C_mid, C), lambda b, h: (0, 0)),
                pl.BlockSpec((C, C_mid), lambda b, h: (0, 0)),
            ],
            out_specs=pl.BlockSpec((1, C, 1), lambda b, h: (b, 0, 0)),
            scratch_shapes=[pltpu.VMEM((C, 1), jnp.float32),
                            pltpu.VMEM((C, 1), jnp.float32)],
        ),
        compiler_params=pltpu.CompilerParams(
            dimension_semantics=("parallel", "arbitrary"),
            vmem_limit_bytes=_clamp_vmem(2 * C * hw_tile_a * itemsize + (4 << 20), vmem_cap),
        ),
    )(x_flat, w1_2d, w2_2d)

    # Pass B: apply the scale, tiled over HW (both grid axes parallel).
    out = pl.pallas_call(
        _apply_kernel,
        out_shape=jax.ShapeDtypeStruct((B, C, HW), x_flat.dtype),
        grid_spec=pltpu.PrefetchScalarGridSpec(
            num_scalar_prefetch=0,
            grid=(B, pl.cdiv(HW, hw_tile_b)),
            in_specs=[
                pl.BlockSpec((1, C, hw_tile_b), lambda b, h: (b, 0, h)),
                pl.BlockSpec((1, C, 1), lambda b, h: (b, 0, 0)),
            ],
            out_specs=pl.BlockSpec((1, C, hw_tile_b), lambda b, h: (b, 0, h)),
        ),
        compiler_params=pltpu.CompilerParams(
            dimension_semantics=("parallel", "parallel"),
            vmem_limit_bytes=_clamp_vmem(4 * C * hw_tile_b * itemsize + (4 << 20), vmem_cap),
        ),
    )(x_flat, scale)
    return out


def channel_attention(x, w1, w2, *,
                      target_block_bytes=4 << 20,
                      max_batch_per_block=128,
                      max_fused_vmem_bytes=None,
                      force_two_pass=False,
                      hw_tile=None):
    """x: (B, C, H, W); w1: (C//r, C, 1, 1); w2: (C, C//r, 1, 1). dtype f32 or bf16."""
    B, C, H, W = x.shape
    HW = H * W
    C_mid = w1.shape[0]
    w1_2d = jnp.asarray(w1).reshape(C_mid, C).astype(jnp.float32)
    w2_2d = jnp.asarray(w2).reshape(C, C_mid).astype(jnp.float32)
    x_flat = x.reshape(B, C, HW)                     # free contiguous reshape (no copy)
    itemsize = jnp.dtype(x.dtype).itemsize

    vmem_cap = _tpu_vmem_capacity()
    if max_fused_vmem_bytes is None:
        # ~half of physical VMEM: ~32 MiB on v7x (64 MiB VMEM), ~64 MiB on v5e/v6e (128 MiB).
        max_fused_vmem_bytes = vmem_cap // 2

    per_batch_bytes = C * HW * itemsize
    # Fused path needs in+out double-buffered with the whole HW resident (bt >= 1).
    use_fused = (not force_two_pass) and (4 * per_batch_bytes + (2 << 20) <= max_fused_vmem_bytes)

    if use_fused:
        out_flat = _channel_attention_fused(
            x_flat, w1_2d, w2_2d,
            target_block_bytes=target_block_bytes,
            max_bt=max_batch_per_block,
            budget=max_fused_vmem_bytes,
            vmem_cap=vmem_cap)
    else:
        out_flat = _channel_attention_two_pass(
            x_flat, w1_2d, w2_2d,
            target_block_bytes=target_block_bytes,
            hw_tile=hw_tile,
            vmem_cap=vmem_cap)

    return out_flat.reshape(B, C, H, W)


def channel_attention_ref(x, w1, w2):
    """Plain-JAX reference mirroring the PyTorch module (f32 math)."""
    B, C, H, W = x.shape
    C_mid = w1.shape[0]
    xf = x.astype(jnp.float32)
    w1_2d = w1.reshape(C_mid, C).astype(jnp.float32)
    w2_2d = w2.reshape(C, C_mid).astype(jnp.float32)

    def fc(p):  # p: (B, C)
        h = jnp.maximum(p @ w1_2d.T, 0.0)
        return jax.nn.sigmoid(h @ w2_2d.T)

    avg = jnp.mean(xf, axis=(2, 3))
    mx = jnp.max(xf, axis=(2, 3))
    scale = fc(avg) + fc(mx)
    return xf * scale[:, :, None, None]


if __name__ == "__main__":
    key = jax.random.PRNGKey(0)
    kx, k1, k2, kx2, kx3 = jax.random.split(key, 5)

    B, C, reduction = 2, 32, 16
    C_mid = C // reduction
    w1 = jax.random.normal(k1, (C_mid, C, 1, 1), dtype=jnp.float32) * 0.1
    w2 = jax.random.normal(k2, (C, C_mid, 1, 1), dtype=jnp.float32) * 0.1

    # 1) fused single-pass path, 128-aligned spatial (16*16 = 256).
    x1 = jax.random.normal(kx, (B, C, 16, 16), dtype=jnp.float32)
    o1 = jax.block_until_ready(channel_attention(x1, w1, w2))
    r1 = channel_attention_ref(x1, w1, w2)
    assert o1.shape == x1.shape
    assert jnp.allclose(o1, r1, atol=1e-5, rtol=1e-5), "fused path mismatch"

    # 2) fused path, unaligned spatial (15*15 = 225) and ragged batch tail (B=3, bt=2):
    #    no host-side pad/slice; partial boundary blocks handled in-kernel / by Pallas masking.
    x2 = jax.random.normal(kx2, (3, C, 15, 15), dtype=jnp.float32)
    o2 = jax.block_until_ready(channel_attention(x2, w1, w2, max_batch_per_block=2))
    r2 = channel_attention_ref(x2, w1, w2)
    assert jnp.allclose(o2, r2, atol=1e-5, rtol=1e-5), "ragged fused path mismatch"

    # 3) forced two-pass HW-tiled fallback (multi-tile reduction, masked partial last tile).
    x3 = jax.random.normal(kx3, (2, C, 24, 24), dtype=jnp.float32)
    o3 = jax.block_until_ready(channel_attention(x3, w1, w2, force_two_pass=True, hw_tile=128))
    r3 = channel_attention_ref(x3, w1, w2)
    assert jnp.allclose(o3, r3, atol=1e-5, rtol=1e-5), "two-pass fallback mismatch"

    # 4) bf16 I/O (pooling accumulates in f32; multiply stays bf16, halving HBM/VMEM traffic).
    x4 = x1.astype(jnp.bfloat16)
    o4 = jax.block_until_ready(channel_attention(x4, w1, w2))
    r4 = channel_attention_ref(x4, w1, w2)
    assert o4.dtype == jnp.bfloat16
    assert jnp.allclose(o4.astype(jnp.float32), r4, atol=5e-2, rtol=5e-2), "bf16 path mismatch"

    print("KERNEL_OK")
</pallas_src>

<mosaic_0001>
module attributes {stable_mosaic.version = 11 : i64} {
  func.func @_fused_kernel(%arg0: i32, %arg1: memref<2x32x256xf32, #tpu.memory_space<vmem>>, %arg2: memref<32x2xf32, #tpu.memory_space<vmem>>, %arg3: memref<2x32xf32, #tpu.memory_space<vmem>>, %arg4: memref<2x32x256xf32, #tpu.memory_space<vmem>>) attributes {dimension_semantics = [#tpu.dimension_semantics<parallel>], iteration_bounds = array<i64: 1>, scalar_prefetch = 0 : i64, scratch_operands = 0 : i64, tpu.core_type = #tpu.core_type<tc>, window_params = [{transform_indices = @transform_0, window_bounds = array<i64: 2, 32, 256>}, {pipeline_mode = #tpu.pipeline_mode<synchronous>, transform_indices = @transform_1, window_bounds = array<i64: 32, 2>}, {pipeline_mode = #tpu.pipeline_mode<synchronous>, transform_indices = @transform_2, window_bounds = array<i64: 2, 32>}, {transform_indices = @transform_3, window_bounds = array<i64: 2, 32, 256>}]} {
    %c0 = arith.constant 0 : index
    %c0_0 = arith.constant 0 : index
    %c0_1 = arith.constant 0 : index
    %0 = vector.load %arg1[%c0, %c0_0, %c0_1] : memref<2x32x256xf32, #tpu.memory_space<vmem>>, vector<2x32x256xf32>
    %c0_2 = arith.constant 0 : index
    %c0_3 = arith.constant 0 : index
    %1 = vector.load %arg2[%c0_2, %c0_3] : memref<32x2xf32, #tpu.memory_space<vmem>>, vector<32x2xf32>
    %c0_4 = arith.constant 0 : index
    %c0_5 = arith.constant 0 : index
    %2 = vector.load %arg3[%c0_4, %c0_5] : memref<2x32xf32, #tpu.memory_space<vmem>>, vector<2x32xf32>
    %cst = arith.constant dense<0.000000e+00> : vector<2x32xf32>
    %3 = vector.multi_reduction <add>, %0, %cst [2] : vector<2x32x256xf32> to vector<2x32xf32>
    %cst_6 = arith.constant 3.906250e-03 : f32
    %4 = vector.broadcast %cst_6 : f32 to vector<2x32xf32>
    %5 = arith.mulf %3, %4 : vector<2x32xf32>
    %cst_7 = arith.constant dense<0xFF800000> : vector<2x32xf32>
    %6 = vector.multi_reduction <maximumf>, %0, %cst_7 [2] : vector<2x32x256xf32> to vector<2x32xf32>
    %7 = tpu.concatenate %5, %6 in 0 : vector<2x32xf32>, vector<2x32xf32> -> vector<4x32xf32>
    %cst_8 = arith.constant dense<0.000000e+00> : vector<4x2xf32>
    %8 = tpu.matmul %7, %1, %cst_8 {dimension_numbers = #tpu.dot_dimension_numbers<[1], [0], [0], [1], [0, 0, 1, 1], [], []>} : vector<4x32xf32>, vector<32x2xf32>, vector<4x2xf32> -> vector<4x2xf32>
    %cst_9 = arith.constant 0.000000e+00 : f32
    %9 = vector.broadcast %cst_9 : f32 to vector<4x2xf32>
    %10 = arith.maximumf %8, %9 : vector<4x2xf32>
    %cst_10 = arith.constant dense<0.000000e+00> : vector<4x32xf32>
    %11 = tpu.matmul %10, %2, %cst_10 {dimension_numbers = #tpu.dot_dimension_numbers<[1], [0], [0], [1], [0, 0, 1, 1], [], []>} : vector<4x2xf32>, vector<2x32xf32>, vector<4x32xf32> -> vector<4x32xf32>
    %12 = arith.negf %11 : vector<4x32xf32>
    %13 = math.exp %12 : vector<4x32xf32>
    %cst_11 = arith.constant 1.000000e+00 : f32
    %14 = vector.broadcast %cst_11 : f32 to vector<4x32xf32>
    %15 = arith.addf %14, %13 : vector<4x32xf32>
    %16 = arith.divf %14, %15 : vector<4x32xf32>
    %17 = vector.extract_strided_slice %16 {offsets = [0, 0], sizes = [2, 32], strides = [1, 1]} : vector<4x32xf32> to vector<2x32xf32>
    %18 = vector.extract_strided_slice %16 {offsets = [2, 0], sizes = [2, 32], strides = [1, 1]} : vector<4x32xf32> to vector<2x32xf32>
    %19 = arith.addf %17, %18 : vector<2x32xf32>
    %20 = vector.shape_cast %19 : vector<2x32xf32> to vector<2x32x1xf32>
    %21 = vector.broadcast %20 : vector<2x32x1xf32> to vector<2x32x256xf32>
    %22 = arith.mulf %0, %21 : vector<2x32x256xf32>
    %c0_12 = arith.constant 0 : index
    %c0_13 = arith.constant 0 : index
    %c0_14 = arith.constant 0 : index
    %23 = vector.load %arg4[%c0_12, %c0_13, %c0_14] : memref<2x32x256xf32, #tpu.memory_space<vmem>>, vector<2x32x256xf32>
    tpu.vector_store %arg4[%c0_12, %c0_13, %c0_14], %22 {strides = array<i32>} : memref<2x32x256xf32, #tpu.memory_space<vmem>>, vector<2x32x256xf32>,
    return
  }
  func.func @transform_0(%arg0: i32) -> (i32, i32, i32) {
    %c0_i32 = arith.constant 0 : i32
    %c0_i32_0 = arith.constant 0 : i32
    %c0_i32_1 = arith.constant 0 : i32
    return %arg0, %c0_i32, %c0_i32_0 : i32, i32, i32
  }
  func.func @transform_1(%arg0: i32) -> (i32, i32) {
    %c0_i32 = arith.constant 0 : i32
    %c0_i32_0 = arith.constant 0 : i32
    %c0_i32_1 = arith.constant 0 : i32
    return %c0_i32, %c0_i32_0 : i32, i32
  }
  func.func @transform_2(%arg0: i32) -> (i32, i32) {
    %c0_i32 = arith.constant 0 : i32
    %c0_i32_0 = arith.constant 0 : i32
    %c0_i32_1 = arith.constant 0 : i32
    return %c0_i32, %c0_i32_0 : i32, i32
  }
  func.func @transform_3(%arg0: i32) -> (i32, i32, i32) {
    %c0_i32 = arith.constant 0 : i32
    %c0_i32_0 = arith.constant 0 : i32
    %c0_i32_1 = arith.constant 0 : i32
    return %arg0, %c0_i32, %c0_i32_0 : i32, i32, i32
  }
}

</mosaic_0001>

<llo_original>
// kernel: tpu_custom_call.1
$region0: #{tpu_custom_call.1}
  #allocation0 [shape = 'u32[]', space=smem, size = 0x4, offset = 0x4, fixed_abs, tag = 'smem constant byte address 0x4 - core index']
  #allocation1 [shape = 'u32[144,128]{1,0:T(1,128)}', space=vmem, size = 0x12000, scoped, tag = 'internal scratch']
  %s0 = inlined_call_operand.hbm [shape: f32[2,32,256], index: 0, kind: input, shape index: {}]
  %s1 = inlined_call_operand.vmem [shape: f32[32,2], index: 1, kind: input, shape index: {}]
  %s2 = inlined_call_operand.vmem [shape: f32[2,32], index: 2, kind: input, shape index: {}]
  %s3 = inlined_call_operand.hbm [shape: f32[2,32,256], index: 3, kind: output, shape index: {}]
  %s4 = sld [smem:[#allocation0]]
  $region26: #{tpu_custom_call.1} parent=0
    _
  %s6 = ssub.s32 1, %s4
  %s7 = scalar_select 0, %s6, %s4
  $region1: #{tpu_custom_call.1} parent=0
    #allocation2 [shape = 'u8[65536]{0}', space=vmem, size = 0x10000, scoped, tag = 'input window, operand 0, single buffered']
    #allocation3 [shape = 's32[1]{0}', space=sflag, size = 0x4, scoped, tag = 'scoped memory for tpu_custom_call.1']
    #allocation4 [shape = 's32[1]{0}', space=sflag, size = 0x4, scoped, tag = 'scoped memory for tpu_custom_call.1']
    #allocation5 [shape = 'u8[65536]{0}', space=vmem, size = 0x10000, scoped, tag = 'output window, operand 0, single buffered']
    %8 = vsyncpa [#allocation3], 0
    %9 = vsyncpa [#allocation4], 0
    // Predicated region
    $region2: #{tpu_custom_call.1} parent=1 // pred_check
      _
    $region3: #{tpu_custom_call.1} parent=1 // pred_check_branch
      %11 = sbr.rel (0) target = $region5
    $region4: #{tpu_custom_call.1} parent=1 // pred_region
      %s13 = ssub.s32 2048, 2048
      %14 = vsyncadd [#allocation3], %s13
      %s15 = sshll.u32 [#allocation2], 4
      %s16 = int_to_ptr.vmem [resolvable:$true] %s15
      %21 = dma.hbm_to_vmem [thread:$0]  %s0, 2048, %s16, [#allocation3], 256, 256, 16
    $region5: #{tpu_custom_call.1} parent=1 // pred_fallthru
      _
    // Predicated region
    $region6: #{tpu_custom_call.1} parent=1 // pred_check
      _
    $region7: #{tpu_custom_call.1} parent=1 // pred_check_branch
      %23 = sbr.rel (0) target = $region9
    $region8: #{tpu_custom_call.1} parent=1 // pred_region
      _
    $region9: #{tpu_custom_call.1} parent=1 // pred_fallthru
      _
    // Predicated region
    $region10: #{tpu_custom_call.1} parent=1 // pred_check
      _
    $region11: #{tpu_custom_call.1} parent=1 // pred_check_branch
      %25 = sbr.rel (0) target = $region13
    $region12: #{tpu_custom_call.1} parent=1 // pred_region
      _
    $region13: #{tpu_custom_call.1} parent=1 // pred_fallthru
      _
    // Predicated region
    $region14: #{tpu_custom_call.1} parent=1 // pred_check
      _
    $region15: #{tpu_custom_call.1} parent=1 // pred_check_branch
      %27 = sbr.rel (0) target = $region17
    $region16: #{tpu_custom_call.1} parent=1 // pred_region
      %28 = dma.done [#allocation3], 2048
    $region17: #{tpu_custom_call.1} parent=1 // pred_fallthru
      _
    %v29 = vld [vmem:[#allocation2] sm:$0xff]
    %v30 = vld [vmem:[#allocation2 + $0x8] sm:$0xff]
    %v31 = vld [vmem:[#allocation2 + $0x10] sm:$0xff]
    %v32 = vld [vmem:[#allocation2 + $0x18] sm:$0xff]
    %v33 = vld [vmem:[#allocation2 + $0x20] sm:$0xff]
    %v34 = vld [vmem:[#allocation2 + $0x28] sm:$0xff]
    %v35 = vld [vmem:[#allocation2 + $0x30] sm:$0xff]
    %v36 = vld [vmem:[#allocation2 + $0x38] sm:$0xff]
    %v37 = vld [vmem:[#allocation2 + $0x40] sm:$0xff]
    %v38 = vld [vmem:[#allocation2 + $0x48] sm:$0xff]
    %v39 = vld [vmem:[#allocation2 + $0x50] sm:$0xff]
    %v40 = vld [vmem:[#allocation2 + $0x58] sm:$0xff]
    %v41 = vld [vmem:[#allocation2 + $0x60] sm:$0xff]
    %v42 = vld [vmem:[#allocation2 + $0x68] sm:$0xff]
    %v43 = vld [vmem:[#allocation2 + $0x70] sm:$0xff]
    %v44 = vld [vmem:[#allocation2 + $0x78] sm:$0xff]
    %v45 = vld [vmem:[%s1] sm:$0xff]
    %v46 = vld [vmem:[%s1 + $0x8] sm:$0xff]
    %v47 = vld [vmem:[%s1 + $0x10] sm:$0xff]
    %v48 = vld [vmem:[%s1 + $0x18] sm:$0xff]
    %v49 = vld [vmem:[%s2] sm:$0x3]
    %v50 = vadd.f32 %v29, %v30
    %51 = vadd.xlane.f32.xlu0 %v50
    %v52 = vpop.xlane.xlu0 %51
    %v53 = vadd.f32 %v31, %v32
    %54 = vadd.xlane.f32.xlu0 %v53
    %v55 = vpop.xlane.xlu0 %54
    %v56 = vadd.f32 %v33, %v34
    %57 = vadd.xlane.f32.xlu0 %v56
    %v58 = vpop.xlane.xlu0 %57
    %v59 = vadd.f32 %v35, %v36
    %60 = vadd.xlane.f32.xlu0 %v59
    %v61 = vpop.xlane.xlu0 %60
    %v62 = vadd.f32 %v37, %v38
    %63 = vadd.xlane.f32.xlu0 %v62
    %v64 = vpop.xlane.xlu0 %63
    %v65 = vadd.f32 %v39, %v40
    %66 = vadd.xlane.f32.xlu0 %v65
    %v67 = vpop.xlane.xlu0 %66
    %v68 = vadd.f32 %v41, %v42
    %69 = vadd.xlane.f32.xlu0 %v68
    %v70 = vpop.xlane.xlu0 %69
    %v71 = vadd.f32 %v43, %v44
    %72 = vadd.xlane.f32.xlu0 %v71
    %v73 = vpop.xlane.xlu0 %72
    %v74 = vmul.f32 %v52, 0.00390625
    %v75 = vmul.f32 %v55, 0.00390625
    %v76 = vmul.f32 %v58, 0.00390625
    %v77 = vmul.f32 %v61, 0.00390625
    %v78 = vmul.f32 %v64, 0.00390625
    %v79 = vmul.f32 %v67, 0.00390625
    %v80 = vmul.f32 %v70, 0.00390625
    %v81 = vmul.f32 %v73, 0.00390625
    %v82 = vmax.f32 %v29, %v30
    %83 = vmax.xlane.f32.xlu0 %v82
    %v84 = vpop.xlane.xlu0 %83
    %v85 = vmax.f32 %v31, %v32
    %86 = vmax.xlane.f32.xlu0 %v85
    %v87 = vpop.xlane.xlu0 %86
    %v88 = vmax.f32 %v33, %v34
    %89 = vmax.xlane.f32.xlu0 %v88
    %v90 = vpop.xlane.xlu0 %89
    %v91 = vmax.f32 %v35, %v36
    %92 = vmax.xlane.f32.xlu0 %v91
    %v93 = vpop.xlane.xlu0 %92
    %v94 = vmax.f32 %v37, %v38
    %95 = vmax.xlane.f32.xlu0 %v94
    %v96 = vpop.xlane.xlu0 %95
    %v97 = vmax.f32 %v39, %v40
    %98 = vmax.xlane.f32.xlu0 %v97
    %v99 = vpop.xlane.xlu0 %98
    %v100 = vmax.f32 %v41, %v42
    %101 = vmax.xlane.f32.xlu0 %v100
    %v102 = vpop.xlane.xlu0 %101
    %v103 = vmax.f32 %v43, %v44
    %104 = vmax.xlane.f32.xlu0 %v103
    %v105 = vpop.xlane.xlu0 %104
    %v114 = vlaneseq
    %v115 = vand.u32 %v114, 127
    %v116 = vlaneseq
    %v117 = vshrl.u32 %v116, 7
    %v118 = vsub.s32 %v115, %v117
    %v119 = vrot.slane %v74, %v118
    %v120 = vadd.s32 %v115, 4294967288
    %v121 = vlaneseq
    %v122 = vshrl.u32 %v121, 7
    %v123 = vsub.s32 %v120, %v122
    %v124 = vrot.slane %v75, %v123
    %vm125 = vcmask 130112
    %v126 = vsel %vm125, %v124, %v119
    %v127 = vadd.s32 %v115, 4294967280
    %v128 = vlaneseq
    %v129 = vshrl.u32 %v128, 7
    %v130 = vsub.s32 %v127, %v129
    %v131 = vrot.slane %v76, %v130
    %vm132 = vcmask 195712
    %v133 = vsel %vm132, %v131, %v126
    %v134 = vadd.s32 %v115, 4294967272
    %v135 = vlaneseq
    %v136 = vshrl.u32 %v135, 7
    %v137 = vsub.s32 %v134, %v136
    %v138 = vrot.slane %v77, %v137
    %vm139 = vcmask 261312
    %v140 = vsel %vm139, %v138, %v133
    %v141 = vlaneseq
    %v142 = vshrl.u32 %v141, 7
    %v143 = vsub.s32 %v115, %v142
    %v144 = vrot.slane %v78, %v143
    %v145 = vlaneseq
    %v146 = vshrl.u32 %v145, 7
    %v147 = vsub.s32 %v120, %v146
    %v148 = vrot.slane %v79, %v147
    %v149 = vsel %vm125, %v148, %v144
    %v150 = vlaneseq
    %v151 = vshrl.u32 %v150, 7
    %v152 = vsub.s32 %v127, %v151
    %v153 = vrot.slane %v80, %v152
    %v154 = vsel %vm132, %v153, %v149
    %v155 = vlaneseq
    %v156 = vshrl.u32 %v155, 7
    %v157 = vsub.s32 %v134, %v156
    %v158 = vrot.slane %v81, %v157
    %v159 = vsel %vm139, %v158, %v154
    %vm160 = vcmask 1041409
    %v161 = vsel %vm160, %v159, %v140
    %v171 = vlaneseq
    %v172 = vshrl.u32 %v171, 7
    %v173 = vsub.s32 %v115, %v172
    %v174 = vrot.slane %v84, %v173
    %v175 = vlaneseq
    %v176 = vshrl.u32 %v175, 7
    %v177 = vsub.s32 %v120, %v176
    %v178 = vrot.slane %v87, %v177
    %v179 = vsel %vm125, %v178, %v174
    %v180 = vlaneseq
    %v181 = vshrl.u32 %v180, 7
    %v182 = vsub.s32 %v127, %v181
    %v183 = vrot.slane %v90, %v182
    %v184 = vsel %vm132, %v183, %v179
    %v185 = vlaneseq
    %v186 = vshrl.u32 %v185, 7
    %v187 = vsub.s32 %v134, %v186
    %v188 = vrot.slane %v93, %v187
    %v189 = vsel %vm139, %v188, %v184
    %v190 = vlaneseq
    %v191 = vshrl.u32 %v190, 7
    %v192 = vsub.s32 %v115, %v191
    %v193 = vrot.slane %v96, %v192
    %v194 = vlaneseq
    %v195 = vshrl.u32 %v194, 7
    %v196 = vsub.s32 %v120, %v195
    %v197 = vrot.slane %v99, %v196
    %v198 = vsel %vm125, %v197, %v193
    %v199 = vlaneseq
    %v200 = vshrl.u32 %v199, 7
    %v201 = vsub.s32 %v127, %v200
    %v202 = vrot.slane %v102, %v201
    %v203 = vsel %vm132, %v202, %v198
    %v204 = vlaneseq
    %v205 = vshrl.u32 %v204, 7
    %v206 = vsub.s32 %v134, %v205
    %v207 = vrot.slane %v105, %v206
    %v208 = vsel %vm139, %v207, %v203
    %vm209 = vcmask 1043459
    %v210 = vsel %vm209, %v208, %v189
    %vm212 = vcmask 1041408
    %v213 = vsel %vm212, %v161, %v210
    %vm214 = vcmask 261120
    %v216 = vsel %vm214, %v213, 0
    %218 = vmatprep.subr.mxu0 0.0
    %219 = vmatpush1.msra.mxu0 %v45
    %220 = vmatprep.subr.mxu0 0.0
    %221 = vmatpush1.msra.mxu0 %v46
    %222 = vmatprep.subr.mxu0 0.0
    %223 = vmatpush1.msra.mxu0 %v47
    %224 = vmatprep.subr.mxu0 0.0
    %225 = vmatpush1.msra.mxu0 %v48
    %226 = vmatprep.subr.mxu0 0.0
    %227 = vmatpush1.msra.mxu0 0.0
    %228 = vmatprep.subr.mxu0 0.0
    %229 = vmatpush1.msra.mxu0 0.0
    %230 = vmatprep.subr.mxu0 0.0
    %231 = vmatpush1.msra.mxu0 0.0
    %232 = vmatprep.subr.mxu0 0.0
    %233 = vmatpush1.msra.mxu0 0.0
    %234 = vmatprep.subr.mxu0 0.0
    %235 = vmatpush1.msra.mxu0 0.0
    %236 = vmatprep.subr.mxu0 0.0
    %237 = vmatpush1.msra.mxu0 0.0
    %238 = vmatprep.subr.mxu0 0.0
    %239 = vmatpush1.msra.mxu0 0.0
    %240 = vmatprep.subr.mxu0 0.0
    %241 = vmatpush1.msra.mxu0 0.0
    %242 = vmatprep.subr.mxu0 0.0
    %243 = vmatpush1.msra.mxu0 0.0
    %244 = vmatprep.subr.mxu0 0.0
    %245 = vmatpush1.msra.mxu0 0.0
    %246 = vmatprep.subr.mxu0 0.0
    %247 = vmatpush1.msra.mxu0 0.0
    %248 = vmatprep.subr.mxu0 0.0
    %249 = vmatpush1.msra.mxu0 0.0
    %250 = vmatprep.subr.mxu0 0.0
    %251 = vmatpush1.msra.mxu0 0.0
    %252 = vmatprep.subr.mxu0 0.0
    %253 = vmatpush1.msra.mxu0 0.0
    %254 = vmatprep.subr.mxu0 0.0
    %255 = vmatpush1.msra.mxu0 0.0
    %256 = vmatprep.subr.mxu0 0.0
    %257 = vmatpush1.msra.mxu0 0.0
    %258 = vmatprep.subr.mxu0 0.0
    %259 = vmatpush1.msra.mxu0 0.0
    %260 = vmatprep.subr.mxu0 0.0
    %261 = vmatpush1.msra.mxu0 0.0
    %262 = vmatprep.subr.mxu0 0.0
    %263 = vmatpush1.msra.mxu0 0.0
    %264 = vmatprep.subr.mxu0 0.0
    %265 = vmatpush1.msra.mxu0 0.0
    %266 = vmatprep.subr.mxu0 0.0
    %267 = vmatpush1.msra.mxu0 0.0
    %268 = vmatprep.subr.mxu0 0.0
    %269 = vmatpush1.msra.mxu0 0.0
    %270 = vmatprep.subr.mxu0 0.0
    %271 = vmatpush1.msra.mxu0 0.0
    %272 = vmatprep.subr.mxu0 0.0
    %273 = vmatpush1.msra.mxu0 0.0
    %274 = vmatprep.subr.mxu0 0.0
    %275 = vmatpush1.msra.mxu0 0.0
    %276 = vmatprep.subr.mxu0 0.0
    %277 = vmatpush1.msra.mxu0 0.0
    %278 = vmatprep.subr.mxu0 0.0
    %279 = vmatpush1.msra.mxu0 0.0
    %280 = vmatprep.subr.mxu0 0.0
    %281 = vmatpush1.msra.mxu0 0.0
    %282 = vmatprep.mubr.f32.mxu0 0.0
    %283 = vmatmul.mubr.f32.gmra.mrb[0].mxu0 %v216
    %v284 = vpop.f32.mrb[0].mxu0
    %v285 = vadd.f32 0.0, %v284
    %v286 = vpop.f32.mrb[0].mxu0
    %287 = vdwg.mxu0
    %v288 = vmax.f32 %v285, 0.0
    %vm289 = vcmask 15360
    %v291 = vsel %vm289, %v288, 0
    %v294 = vsel %vm212, %v49, 0
    %296 = vmatprep.subr.mxu0 0.0
    %297 = vmatpush1.msra.mxu0 %v294
    %298 = vmatprep.subr.mxu0 0.0
    %299 = vmatpush1.msra.mxu0 0.0
    %300 = vmatprep.subr.mxu0 0.0
    %301 = vmatpush1.msra.mxu0 0.0
    %302 = vmatprep.subr.mxu0 0.0
    %303 = vmatpush1.msra.mxu0 0.0
    %304 = vmatprep.subr.mxu0 0.0
    %305 = vmatpush1.msra.mxu0 0.0
    %306 = vmatprep.subr.mxu0 0.0
    %307 = vmatpush1.msra.mxu0 0.0
    %308 = vmatprep.subr.mxu0 0.0
    %309 = vmatpush1.msra.mxu0 0.0
    %310 = vmatprep.subr.mxu0 0.0
    %311 = vmatpush1.msra.mxu0 0.0
    %312 = vmatprep.subr.mxu0 0.0
    %313 = vmatpush1.msra.mxu0 0.0
    %314 = vmatprep.subr.mxu0 0.0
    %315 = vmatpush1.msra.mxu0 0.0
    %316 = vmatprep.subr.mxu0 0.0
    %317 = vmatpush1.msra.mxu0 0.0
    %318 = vmatprep.subr.mxu0 0.0
    %319 = vmatpush1.msra.mxu0 0.0
    %320 = vmatprep.subr.mxu0 0.0
    %321 = vmatpush1.msra.mxu0 0.0
    %322 = vmatprep.subr.mxu0 0.0
    %323 = vmatpush1.msra.mxu0 0.0
    %324 = vmatprep.subr.mxu0 0.0
    %325 = vmatpush1.msra.mxu0 0.0
    %326 = vmatprep.subr.mxu0 0.0
    %327 = vmatpush1.msra.mxu0 0.0
    %328 = vmatprep.subr.mxu0 0.0
    %329 = vmatpush1.msra.mxu0 0.0
    %330 = vmatprep.subr.mxu0 0.0
    %331 = vmatpush1.msra.mxu0 0.0
    %332 = vmatprep.subr.mxu0 0.0
    %333 = vmatpush1.msra.mxu0 0.0
    %334 = vmatprep.subr.mxu0 0.0
    %335 = vmatpush1.msra.mxu0 0.0
    %336 = vmatprep.subr.mxu0 0.0
    %337 = vmatpush1.msra.mxu0 0.0
    %338 = vmatprep.subr.mxu0 0.0
    %339 = vmatpush1.msra.mxu0 0.0
    %340 = vmatprep.subr.mxu0 0.0
    %341 = vmatpush1.msra.mxu0 0.0
    %342 = vmatprep.subr.mxu0 0.0
    %343 = vmatpush1.msra.mxu0 0.0
    %344 = vmatprep.subr.mxu0 0.0
    %345 = vmatpush1.msra.mxu0 0.0
    %346 = vmatprep.subr.mxu0 0.0
    %347 = vmatpush1.msra.mxu0 0.0
    %348 = vmatprep.subr.mxu0 0.0
    %349 = vmatpush1.msra.mxu0 0.0
    %350 = vmatprep.subr.mxu0 0.0
    %351 = vmatpush1.msra.mxu0 0.0
    %352 = vmatprep.subr.mxu0 0.0
    %353 = vmatpush1.msra.mxu0 0.0
    %354 = vmatprep.subr.mxu0 0.0
    %355 = vmatpush1.msra.mxu0 0.0
    %356 = vmatprep.subr.mxu0 0.0
    %357 = vmatpush1.msra.mxu0 0.0
    %358 = vmatprep.subr.mxu0 0.0
    %359 = vmatpush1.msra.mxu0 0.0
    %360 = vmatprep.mubr.f32.mxu0 0.0
    %361 = vmatmul.mubr.f32.gmra.mrb[0].mxu0 %v291
    %v362 = vpop.f32.mrb[0].mxu0
    %v363 = vadd.f32 0.0, %v362
    %v364 = vpop.f32.mrb[0].mxu0
    %365 = vdwg.mxu0
    %v366 = vxor.u32 %v363, 2147483648
    %v367 = vmul.f32 %v366, 1.442695
    %v368 = vpow.pop %v367
    %v369 = vadd.f32 %v368, 1.0
    %v370 = vrcp.pop %v369
    %v371 = vmul.f32 1.0, %v370
    %v373 = vrot.slane %v371, 2
    %v375 = vadd.f32 %v371, %v373
    %v376 = vlaneseq
    %v377 = vshrl.u32 %v376, 7
    %v378 = vsub.s32 0, %v377
    %v379 = vrot.slane %v375, %v378
    %381 = vbcast.lane.b32.xlu0 %v379, 256
    %v382 = vpop.permute.xlu0 %381
    %s384 = sor.u32 256, 8
    %385 = vbcast.lane.b32.xlu0 %v379, %s384
    %v386 = vpop.permute.xlu0 %385
    %s388 = sor.u32 256, 16
    %389 = vbcast.lane.b32.xlu0 %v379, %s388
    %v390 = vpop.permute.xlu0 %389
    %s392 = sor.u32 256, 24
    %393 = vbcast.lane.b32.xlu0 %v379, %s392
    %v394 = vpop.permute.xlu0 %393
    %v395 = vlaneseq
    %v396 = vshrl.u32 %v395, 7
    %v397 = vsub.s32 1, %v396
    %v398 = vrot.slane %v375, %v397
    %400 = vbcast.lane.b32.xlu0 %v398, 256
    %v401 = vpop.permute.xlu0 %400
    %s403 = sor.u32 256, 8
    %404 = vbcast.lane.b32.xlu0 %v398, %s403
    %v405 = vpop.permute.xlu0 %404
    %s407 = sor.u32 256, 16
    %408 = vbcast.lane.b32.xlu0 %v398, %s407
    %v409 = vpop.permute.xlu0 %408
    %s411 = sor.u32 256, 24
    %412 = vbcast.lane.b32.xlu0 %v398, %s411
    %v413 = vpop.permute.xlu0 %412
    %v414 = vmul.f32 %v29, %v382
    %v415 = vmul.f32 %v30, %v382
    %v416 = vmul.f32 %v31, %v386
    %v417 = vmul.f32 %v32, %v386
    %v418 = vmul.f32 %v33, %v390
    %v419 = vmul.f32 %v34, %v390
    %v420 = vmul.f32 %v35, %v394
    %v421 = vmul.f32 %v36, %v394
    %v422 = vmul.f32 %v37, %v401
    %v423 = vmul.f32 %v38, %v401
    %v424 = vmul.f32 %v39, %v405
    %v425 = vmul.f32 %v40, %v405
    %v426 = vmul.f32 %v41, %v409
    %v427 = vmul.f32 %v42, %v409
    %v428 = vmul.f32 %v43, %v413
    %v429 = vmul.f32 %v44, %v413
    %430 = vst [vmem:[#allocation5] sm:$0xff] %v414
    %431 = vst [vmem:[#allocation5 + $0x8] sm:$0xff] %v415
    %432 = vst [vmem:[#allocation5 + $0x10] sm:$0xff] %v416
    %433 = vst [vmem:[#allocation5 + $0x18] sm:$0xff] %v417
    %434 = vst [vmem:[#allocation5 + $0x20] sm:$0xff] %v418
    %435 = vst [vmem:[#allocation5 + $0x28] sm:$0xff] %v419
    %436 = vst [vmem:[#allocation5 + $0x30] sm:$0xff] %v420
    %437 = vst [vmem:[#allocation5 + $0x38] sm:$0xff] %v421
    %438 = vst [vmem:[#allocation5 + $0x40] sm:$0xff] %v422
    %439 = vst [vmem:[#allocation5 + $0x48] sm:$0xff] %v423
    %440 = vst [vmem:[#allocation5 + $0x50] sm:$0xff] %v424
    %441 = vst [vmem:[#allocation5 + $0x58] sm:$0xff] %v425
    %442 = vst [vmem:[#allocation5 + $0x60] sm:$0xff] %v426
    %443 = vst [vmem:[#allocation5 + $0x68] sm:$0xff] %v427
    %444 = vst [vmem:[#allocation5 + $0x70] sm:$0xff] %v428
    %445 = vst [vmem:[#allocation5 + $0x78] sm:$0xff] %v429
    // Predicated region
    $region18: #{tpu_custom_call.1} parent=1 // pred_check
      _
    $region19: #{tpu_custom_call.1} parent=1 // pred_check_branch
      %447 = sbr.rel (0) target = $region21
    $region20: #{tpu_custom_call.1} parent=1 // pred_region
      %s449 = ssub.s32 2048, 2048
      %450 = vsyncadd [#allocation4], %s449
      %s451 = sshll.u32 [#allocation5], 4
      %s452 = int_to_ptr.vmem [resolvable:$true] %s451
      %457 = dma.vmem_to_hbm [thread:$0]  %s452, 2048, %s3, [#allocation4], 256, 256, 16
    $region21: #{tpu_custom_call.1} parent=1 // pred_fallthru
      _
    // Predicated region
    $region22: #{tpu_custom_call.1} parent=1 // pred_check
      _
    $region23: #{tpu_custom_call.1} parent=1 // pred_check_branch
      %459 = sbr.rel (0) target = $region25
    $region24: #{tpu_custom_call.1} parent=1 // pred_region
      %460 = dma.done [#allocation4], 2048
    $region25: #{tpu_custom_call.1} parent=1 // pred_fallthru
      _
    %461 = vsyncpa [#allocation3], 1
    %462 = vsyncpa [#allocation4], 1

</llo_original>
